<compile_context>
chip_gen: v7x
topology: tpu7x:2x2x1
jax: 0.10.0
libtpu: 0.0.40
codegen_flags: <defaults>
</compile_context>

<pallas_src>
import jax
import jax.numpy as jnp
from jax import lax
from jax.experimental import pallas as pl
from jax.experimental.pallas import tpu as pltpu

ALPHA = 0.01                        # LeakyReLU negative slope
LN_EPS = 1e-5                       # nn.LayerNorm default eps
_A_TILE_BYTES = 8 * 1024 * 1024     # target bytes per streamed A row-slab
_VMEM_FALLBACK = 48 * 1024 * 1024   # safe scoped-VMEM cap if TPU info is unavailable


def _leaky_relu(x):
    return jnp.where(x >= 0, x, ALPHA * x)


def _round_up(x, m):
    return ((x + m - 1) // m) * m


def _pick_tile(n, candidates):
    """Largest candidate tile that divides n; fall back to the full extent."""
    for c in candidates:
        if c <= n and n % c == 0:
            return c
    return n


def _vmem_limit_bytes():
    """~3/4 of physical VMEM: ~96 MiB on v5e/v6e (128 MiB), ~48 MiB on v7x (64 MiB)."""
    try:
        cap = pltpu.get_tpu_info().vmem_capacity_bytes
        return int(cap * 3 // 4)
    except Exception:
        return _VMEM_FALLBACK


def _choose_row_tile(n, itemsize, max_bytes):
    """Pick (ti, n_pad): row-slab height ti (power of two, sublane-aligned) so a
    full-width (ti, n_pad) A slab is ~max_bytes, and the padded node count n_pad."""
    align = 32 if itemsize == 1 else 16          # sublane alignment by dtype width
    n_al = _round_up(n, align)
    rows = max_bytes // (itemsize * n_al)
    if rows >= n_al:
        return n_al, n_al                        # a single slab covers everything
    ti = 1 << (max(int(rows), 1).bit_length() - 1)   # largest power of two <= rows
    ti = max(min(ti, 2048), align)
    return ti, _round_up(n, ti)


# ---------------- Pass 1: P = softmax(LayerNorm(LeakyReLU(Z @ W + b))) ----------------
def _p_kernel(z_ref, w_ref, b_ref, g_ref, be_ref, p_ref):
    Z = z_ref[...].astype(jnp.float32)                        # (tn, q)
    W = w_ref[...]                                            # (q, k) f32
    M = jnp.dot(Z, W, preferred_element_type=jnp.float32) + b_ref[...]
    M = _leaky_relu(M)
    # LayerNorm over last dim (biased variance, matching nn.LayerNorm)
    mu = jnp.mean(M, axis=1, keepdims=True)
    var = jnp.mean((M - mu) ** 2, axis=1, keepdims=True)
    H = (M - mu) * lax.rsqrt(var + LN_EPS) * g_ref[...] + be_ref[...]
    # Softmax over dim 1; reciprocal on the EUP (uniform per-row scale -> argmax unaffected)
    Hm = jnp.max(H, axis=1, keepdims=True)
    E = jnp.exp(H - Hm)
    P = E * pl.reciprocal(jnp.sum(E, axis=1, keepdims=True), approx=True)
    p_ref[...] = P.astype(p_ref.dtype)


# ---------------- Pass 2: Xt_partial = P^T @ Z, At_partial = P^T @ A @ P --------------
def _xt_at_kernel(pi_ref, pf_ref, a_ref, z_ref, xt_ref, at_ref, xt_acc, at_acc):
    i = pl.program_id(1)                                      # row-block index within shard

    @pl.when(i == 0)
    def _():
        xt_acc[...] = jnp.zeros_like(xt_acc)
        at_acc[...] = jnp.zeros_like(at_acc)

    Pi = pi_ref[...]                                          # (ti, k) f32
    A = a_ref[...]                                            # (ti, n_pad) native dtype
    Pf = pf_ref[...]                                          # (n_pad, k) f32

    if jnp.issubdtype(a_ref.dtype, jnp.floating) and a_ref.dtype != jnp.float32:
        # Low-precision A stream (bf16 / fp8 -- exact for 0/1 adjacency): feed the MXU
        # at A's dtype, accumulate in f32. No f32 upcast sweep / temp over the A slab.
        APf = jnp.dot(A, Pf.astype(a_ref.dtype), preferred_element_type=jnp.float32)
    else:
        # f32 A: astype is a no-op.
        # TODO(synk): an int8 cached-A path (v5e/v6e integer MXU) would go here.
        APf = jnp.dot(A.astype(jnp.float32), Pf, preferred_element_type=jnp.float32)

    # Pi^T @ (.) without materializing transposes: contract dim 0 with dim 0.
    at_acc[...] += lax.dot_general(Pi, APf, (((0,), (0,)), ((), ())),
                                   preferred_element_type=jnp.float32)   # (k, k)
    Z = z_ref[...].astype(jnp.float32)                        # (ti, q)
    xt_acc[...] += lax.dot_general(Pi, Z, (((0,), (0,)), ((), ())),
                                   preferred_element_type=jnp.float32)   # (k, q)

    @pl.when(i == pl.num_programs(1) - 1)
    def _():
        xt_ref[...] = xt_acc[...]
        at_ref[...] = at_acc[...]


def comm_dense_layer2(Z, A, W, b, gamma, beta, *, max_a_tile_bytes=_A_TILE_BYTES):
    """Returns (X_tilde, A_tilde, P, S) matching the PyTorch module forward
    (operator='Linear', norm=True). A and Z are streamed in their given dtypes."""
    N, q = Z.shape
    k = W.shape[1]
    assert A.shape == (N, N)

    ti, n_pad = _choose_row_tile(N, jnp.dtype(A.dtype).itemsize, max_a_tile_bytes)
    pad = n_pad - N
    Zp = Z if pad == 0 else jnp.pad(Z, ((0, pad), (0, 0)))
    Ap = A if pad == 0 else jnp.pad(A, ((0, pad), (0, pad)))

    Wf = W.astype(jnp.float32)
    b2 = b.reshape(1, k).astype(jnp.float32)
    g2 = gamma.reshape(1, k).astype(jnp.float32)
    be2 = beta.reshape(1, k).astype(jnp.float32)

    vmem_limit = _vmem_limit_bytes()

    # ---------------- Pass 1 ----------------
    tn = _pick_tile(n_pad, (256, 128, 64, 32, 16))
    p = pl.pallas_call(
        _p_kernel,
        out_shape=jax.ShapeDtypeStruct((n_pad, k), jnp.float32),
        grid=(n_pad // tn,),
        in_specs=[
            pl.BlockSpec((tn, q), lambda i: (i, 0)),
            pl.BlockSpec((q, k), lambda i: (0, 0)),
            pl.BlockSpec((1, k), lambda i: (0, 0)),
            pl.BlockSpec((1, k), lambda i: (0, 0)),
            pl.BlockSpec((1, k), lambda i: (0, 0)),
        ],
        out_specs=pl.BlockSpec((tn, k), lambda i: (i, 0)),
        compiler_params=pltpu.CompilerParams(
            dimension_semantics=("parallel",),
            vmem_limit_bytes=vmem_limit),
    )(Zp, Wf, b2, g2, be2)

    # ---------------- Pass 2 ----------------
    n_blocks = n_pad // ti
    shards = 2 if (n_blocks >= 4 and n_blocks % 2 == 0) else 1   # dual-TC split on v7x
    bps = n_blocks // shards

    xt_p, at_p = pl.pallas_call(
        _xt_at_kernel,
        out_shape=(jax.ShapeDtypeStruct((shards, k, q), jnp.float32),   # partial P^T Z
                   jax.ShapeDtypeStruct((shards, k, k), jnp.float32)),  # partial P^T A P
        grid=(shards, bps),
        in_specs=[
            pl.BlockSpec((ti, k), lambda c, i: (c * bps + i, 0)),       # P row block
            pl.BlockSpec((n_pad, k), lambda c, i: (0, 0)),              # P (resident)
            pl.BlockSpec((ti, n_pad), lambda c, i: (c * bps + i, 0)),   # A row slab (native dtype)
            pl.BlockSpec((ti, q), lambda c, i: (c * bps + i, 0)),       # Z row block
        ],
        out_specs=(
            pl.BlockSpec((None, k, q), lambda c, i: (c, 0, 0)),
            pl.BlockSpec((None, k, k), lambda c, i: (c, 0, 0)),
        ),
        scratch_shapes=[
            pltpu.VMEM((k, q), jnp.float32),                            # Xt accumulator
            pltpu.VMEM((k, k), jnp.float32),                            # At accumulator
        ],
        compiler_params=pltpu.CompilerParams(
            dimension_semantics=("parallel", "arbitrary"),
            vmem_limit_bytes=vmem_limit),
    )(p, p, Ap, Zp)

    xt_lin = jnp.sum(xt_p, axis=0)                 # (k, q) = P^T Z
    xt = _leaky_relu(xt_lin)                       # LeakyReLU after the shard sum (nonlinear)
    at = jnp.sum(at_p, axis=0)                     # (k, k)

    p_out = p[:N] if pad else p
    s = jnp.argmax(p_out, axis=1)                  # first-occurrence tie-break, like torch.argmax
    return xt, at, p_out, s


def _reference(Z, A, W, b, gamma, beta):
    """Pure-JAX reference of the PyTorch forward (operator='Linear', norm=True)."""
    Zf = Z.astype(jnp.float32)
    Af = A.astype(jnp.float32)
    M = Zf @ W + b[None, :]
    M = jnp.where(M >= 0, M, ALPHA * M)
    mu = jnp.mean(M, axis=1, keepdims=True)
    var = jnp.mean((M - mu) ** 2, axis=1, keepdims=True)
    H = (M - mu) / jnp.sqrt(var + LN_EPS) * gamma[None, :] + beta[None, :]
    P = jax.nn.softmax(H, axis=1)
    ZtP = Zf.T @ P
    Xt = jnp.where(ZtP >= 0, ZtP, ALPHA * ZtP).T
    At = P.T @ (Af @ P)
    S = jnp.argmax(P, axis=1)
    return Xt, At, P, S


def _make_inputs(seed, N, q, k, affine_ln):
    key = jax.random.PRNGKey(seed)
    kz, ka, kw, kb, kg, kbe = jax.random.split(key, 6)
    Z = jax.random.normal(kz, (N, q), dtype=jnp.float32)
    # symmetric 0/1 adjacency with no self-loops (exactly representable in bf16)
    A_rand = (jax.random.uniform(ka, (N, N)) > 0.7).astype(jnp.float32)
    A = jnp.triu(A_rand, 1)
    A = A + A.T
    W = jax.random.normal(kw, (q, k), dtype=jnp.float32) * (1.0 / jnp.sqrt(q))
    b = jax.random.normal(kb, (k,), dtype=jnp.float32) * 0.1
    if affine_ln:
        gamma = 1.0 + 0.1 * jax.random.normal(kg, (k,), dtype=jnp.float32)
        beta = 0.1 * jax.random.normal(kbe, (k,), dtype=jnp.float32)
    else:
        gamma = jnp.ones((k,), dtype=jnp.float32)
        beta = jnp.zeros((k,), dtype=jnp.float32)
    return Z, A, W, b, gamma, beta


if __name__ == "__main__":
    # ---- Test 1: small, tile == full extent, f32 A streamed natively ----
    Z, A, W, b, gamma, beta = _make_inputs(0, N=16, q=32, k=8, affine_ln=False)
    Xt, At, P, S = comm_dense_layer2(Z, A, W, b, gamma, beta)
    jax.block_until_ready((Xt, At, P, S))
    Xt_r, At_r, P_r, S_r = _reference(Z, A, W, b, gamma, beta)
    assert jnp.allclose(P, P_r, atol=2e-3, rtol=2e-3)
    assert jnp.allclose(Xt, Xt_r, atol=5e-3, rtol=5e-3)
    assert jnp.allclose(At, At_r, atol=5e-3, rtol=5e-3)
    assert jnp.array_equal(S, S_r)

    # ---- Test 1b: cached low-precision adjacency (bf16 MXU path, no f32 upcast) ----
    Xt_b, At_b, P_b, S_b = comm_dense_layer2(Z, A.astype(jnp.bfloat16), W, b, gamma, beta)
    jax.block_until_ready((Xt_b, At_b, P_b, S_b))
    assert jnp.allclose(At_b, At_r, atol=3e-2, rtol=3e-2)
    assert jnp.array_equal(S_b, S_r)

    # ---- Test 2: non-divisible N (padding), multi-block rows, 2-way shard axis ----
    Z2, A2, W2, b2, g2, be2 = _make_inputs(1, N=200, q=32, k=10, affine_ln=True)
    # small tile budget to force ti < N (multi-block + padded tail + shard split)
    Xt2, At2, P2, S2 = comm_dense_layer2(Z2, A2, W2, b2, g2, be2,
                                         max_a_tile_bytes=64 * 1024)
    jax.block_until_ready((Xt2, At2, P2, S2))
    Xt2_r, At2_r, P2_r, S2_r = _reference(Z2, A2, W2, b2, g2, be2)
    assert P2.shape == P2_r.shape
    assert jnp.allclose(P2, P2_r, atol=2e-3, rtol=2e-3)
    assert jnp.allclose(Xt2, Xt2_r, atol=1e-2, rtol=1e-2)
    assert jnp.allclose(At2, At2_r, atol=1e-2, rtol=1e-2)
    assert jnp.array_equal(S2, S2_r)

    print("KERNEL_OK")
</pallas_src>

<mosaic_0001>
module attributes {stable_mosaic.version = 11 : i64} {
  func.func @_p_kernel(%arg0: i32, %arg1: memref<16x32xf32, #tpu.memory_space<vmem>>, %arg2: memref<32x8xf32, #tpu.memory_space<vmem>>, %arg3: memref<1x8xf32, #tpu.memory_space<vmem>>, %arg4: memref<1x8xf32, #tpu.memory_space<vmem>>, %arg5: memref<1x8xf32, #tpu.memory_space<vmem>>, %arg6: memref<16x8xf32, #tpu.memory_space<vmem>>) attributes {dimension_semantics = [#tpu.dimension_semantics<parallel>], iteration_bounds = array<i64: 1>, scalar_prefetch = 0 : i64, scratch_operands = 0 : i64, tpu.core_type = #tpu.core_type<tc>, window_params = [{transform_indices = @transform_0, window_bounds = array<i64: 16, 32>}, {pipeline_mode = #tpu.pipeline_mode<synchronous>, transform_indices = @transform_1, window_bounds = array<i64: 32, 8>}, {pipeline_mode = #tpu.pipeline_mode<synchronous>, transform_indices = @transform_2, window_bounds = array<i64: 1, 8>}, {pipeline_mode = #tpu.pipeline_mode<synchronous>, transform_indices = @transform_3, window_bounds = array<i64: 1, 8>}, {pipeline_mode = #tpu.pipeline_mode<synchronous>, transform_indices = @transform_4, window_bounds = array<i64: 1, 8>}, {transform_indices = @transform_5, window_bounds = array<i64: 16, 8>}]} {
    %c0 = arith.constant 0 : index
    %c0_0 = arith.constant 0 : index
    %0 = vector.load %arg1[%c0, %c0_0] : memref<16x32xf32, #tpu.memory_space<vmem>>, vector<16x32xf32>
    %c0_1 = arith.constant 0 : index
    %c0_2 = arith.constant 0 : index
    %1 = vector.load %arg2[%c0_1, %c0_2] : memref<32x8xf32, #tpu.memory_space<vmem>>, vector<32x8xf32>
    %cst = arith.constant dense<0.000000e+00> : vector<16x8xf32>
    %2 = tpu.matmul %0, %1, %cst {dimension_numbers = #tpu.dot_dimension_numbers<[1], [0], [0], [1], [0, 0, 1, 1], [], []>} : vector<16x32xf32>, vector<32x8xf32>, vector<16x8xf32> -> vector<16x8xf32>
    %c0_3 = arith.constant 0 : index
    %c0_4 = arith.constant 0 : index
    %3 = vector.load %arg3[%c0_3, %c0_4] : memref<1x8xf32, #tpu.memory_space<vmem>>, vector<1x8xf32>
    %4 = vector.broadcast %3 : vector<1x8xf32> to vector<16x8xf32>
    %5 = arith.addf %2, %4 : vector<16x8xf32>
    %cst_5 = arith.constant 0.000000e+00 : f32
    %6 = vector.broadcast %cst_5 : f32 to vector<16x8xf32>
    %7 = arith.cmpf oge, %5, %6 : vector<16x8xf32>
    %cst_6 = arith.constant 0.00999999977 : f32
    %8 = vector.broadcast %cst_6 : f32 to vector<16x8xf32>
    %9 = arith.mulf %8, %5 : vector<16x8xf32>
    %10 = arith.select %7, %5, %9 : vector<16x8xi1>, vector<16x8xf32>
    %cst_7 = arith.constant dense<0.000000e+00> : vector<16xf32>
    %11 = vector.multi_reduction <add>, %10, %cst_7 [1] : vector<16x8xf32> to vector<16xf32>
    %12 = vector.shape_cast %11 : vector<16xf32> to vector<16x1xf32>
    %cst_8 = arith.constant 8.000000e+00 : f32
    %13 = vector.broadcast %cst_8 : f32 to vector<16x1xf32>
    %14 = arith.divf %12, %13 : vector<16x1xf32>
    %15 = vector.broadcast %14 : vector<16x1xf32> to vector<16x8xf32>
    %16 = arith.subf %10, %15 : vector<16x8xf32>
    %17 = arith.mulf %16, %16 : vector<16x8xf32>
    %cst_9 = arith.constant dense<0.000000e+00> : vector<16xf32>
    %18 = vector.multi_reduction <add>, %17, %cst_9 [1] : vector<16x8xf32> to vector<16xf32>
    %19 = vector.shape_cast %18 : vector<16xf32> to vector<16x1xf32>
    %cst_10 = arith.constant 8.000000e+00 : f32
    %20 = vector.broadcast %cst_10 : f32 to vector<16x1xf32>
    %21 = arith.divf %19, %20 : vector<16x1xf32>
    %22 = vector.broadcast %14 : vector<16x1xf32> to vector<16x8xf32>
    %23 = arith.subf %10, %22 : vector<16x8xf32>
    %cst_11 = arith.constant 9.99999974E-6 : f32
    %24 = vector.broadcast %cst_11 : f32 to vector<16x1xf32>
    %25 = arith.addf %21, %24 : vector<16x1xf32>
    %26 = math.rsqrt %25 : vector<16x1xf32>
    %27 = vector.broadcast %26 : vector<16x1xf32> to vector<16x8xf32>
    %28 = arith.mulf %23, %27 : vector<16x8xf32>
    %c0_12 = arith.constant 0 : index
    %c0_13 = arith.constant 0 : index
    %29 = vector.load %arg4[%c0_12, %c0_13] : memref<1x8xf32, #tpu.memory_space<vmem>>, vector<1x8xf32>
    %30 = vector.broadcast %29 : vector<1x8xf32> to vector<16x8xf32>
    %31 = arith.mulf %28, %30 : vector<16x8xf32>
    %c0_14 = arith.constant 0 : index
    %c0_15 = arith.constant 0 : index
    %32 = vector.load %arg5[%c0_14, %c0_15] : memref<1x8xf32, #tpu.memory_space<vmem>>, vector<1x8xf32>
    %33 = vector.broadcast %32 : vector<1x8xf32> to vector<16x8xf32>
    %34 = arith.addf %31, %33 : vector<16x8xf32>
    %cst_16 = arith.constant dense<0xFF800000> : vector<16xf32>
    %35 = vector.multi_reduction <maximumf>, %34, %cst_16 [1] : vector<16x8xf32> to vector<16xf32>
    %36 = vector.shape_cast %35 : vector<16xf32> to vector<16x1xf32>
    %37 = vector.broadcast %36 : vector<16x1xf32> to vector<16x8xf32>
    %38 = arith.subf %34, %37 : vector<16x8xf32>
    %39 = math.exp %38 : vector<16x8xf32>
    %cst_17 = arith.constant dense<0.000000e+00> : vector<16xf32>
    %40 = vector.multi_reduction <add>, %39, %cst_17 [1] : vector<16x8xf32> to vector<16xf32>
    %41 = vector.shape_cast %40 : vector<16xf32> to vector<16x1xf32>
    %42 = tpu.reciprocal %41 {approx = true} : vector<16x1xf32> -> vector<16x1xf32>
    %43 = vector.broadcast %42 : vector<16x1xf32> to vector<16x8xf32>
    %44 = arith.mulf %39, %43 : vector<16x8xf32>
    %c0_18 = arith.constant 0 : index
    %c0_19 = arith.constant 0 : index
    %45 = vector.load %arg6[%c0_18, %c0_19] : memref<16x8xf32, #tpu.memory_space<vmem>>, vector<16x8xf32>
    tpu.vector_store %arg6[%c0_18, %c0_19], %44 {strides = array<i32>} : memref<16x8xf32, #tpu.memory_space<vmem>>, vector<16x8xf32>,
    return
  }
  func.func @transform_0(%arg0: i32) -> (i32, i32) {
    %c0_i32 = arith.constant 0 : i32
    %c0_i32_0 = arith.constant 0 : i32
    return %arg0, %c0_i32 : i32, i32
  }
  func.func @transform_1(%arg0: i32) -> (i32, i32) {
    %c0_i32 = arith.constant 0 : i32
    %c0_i32_0 = arith.constant 0 : i32
    %c0_i32_1 = arith.constant 0 : i32
    return %c0_i32, %c0_i32_0 : i32, i32
  }
  func.func @transform_2(%arg0: i32) -> (i32, i32) {
    %c0_i32 = arith.constant 0 : i32
    %c0_i32_0 = arith.constant 0 : i32
    %c0_i32_1 = arith.constant 0 : i32
    return %c0_i32, %c0_i32_0 : i32, i32
  }
  func.func @transform_3(%arg0: i32) -> (i32, i32) {
    %c0_i32 = arith.constant 0 : i32
    %c0_i32_0 = arith.constant 0 : i32
    %c0_i32_1 = arith.constant 0 : i32
    return %c0_i32, %c0_i32_0 : i32, i32
  }
  func.func @transform_4(%arg0: i32) -> (i32, i32) {
    %c0_i32 = arith.constant 0 : i32
    %c0_i32_0 = arith.constant 0 : i32
    %c0_i32_1 = arith.constant 0 : i32
    return %c0_i32, %c0_i32_0 : i32, i32
  }
  func.func @transform_5(%arg0: i32) -> (i32, i32) {
    %c0_i32 = arith.constant 0 : i32
    %c0_i32_0 = arith.constant 0 : i32
    return %arg0, %c0_i32 : i32, i32
  }
}

</mosaic_0001>

<llo_original>
// kernel: tpu_custom_call.1
$region0: #{tpu_custom_call.1}
  #allocation0 [shape = 'u32[]', space=smem, size = 0x4, offset = 0x4, fixed_abs, tag = 'smem constant byte address 0x4 - core index']
  #allocation1 [shape = 'u32[144,128]{1,0:T(1,128)}', space=vmem, size = 0x12000, scoped, tag = 'internal scratch']
  %s0 = inlined_call_operand.vmem [shape: f32[16,32], index: 0, kind: input, shape index: {}]
  %s1 = inlined_call_operand.vmem [shape: f32[32,8], index: 1, kind: input, shape index: {}]
  %s2 = inlined_call_operand.vmem [shape: f32[1,8], index: 2, kind: input, shape index: {}]
  %s3 = inlined_call_operand.vmem [shape: f32[1,8], index: 3, kind: input, shape index: {}]
  %s4 = inlined_call_operand.vmem [shape: f32[1,8], index: 4, kind: input, shape index: {}]
  %s5 = inlined_call_operand.vmem [shape: f32[16,8], index: 5, kind: output, shape index: {}]
  %s6 = sld [smem:[#allocation0]]
  $region30: #{tpu_custom_call.1} parent=0
    _
  %s8 = ssub.s32 1, %s6
  %s9 = scalar_select 0, %s8, %s6
  // Predicated region
  $region2: #{tpu_custom_call.1} parent=0 // pred_check
    _
  $region3: #{tpu_custom_call.1} parent=0 // pred_check_branch
    %11 = sbr.rel (0) target = $region5
  $region4: #{tpu_custom_call.1} parent=0 // pred_region
    _
  $region5: #{tpu_custom_call.1} parent=0 // pred_fallthru
    _
  // Predicated region
  $region6: #{tpu_custom_call.1} parent=0 // pred_check
    _
  $region7: #{tpu_custom_call.1} parent=0 // pred_check_branch
    %13 = sbr.rel (0) target = $region9
  $region8: #{tpu_custom_call.1} parent=0 // pred_region
    _
  $region9: #{tpu_custom_call.1} parent=0 // pred_fallthru
    _
  // Predicated region
  $region10: #{tpu_custom_call.1} parent=0 // pred_check
    _
  $region11: #{tpu_custom_call.1} parent=0 // pred_check_branch
    %15 = sbr.rel (0) target = $region13
  $region12: #{tpu_custom_call.1} parent=0 // pred_region
    _
  $region13: #{tpu_custom_call.1} parent=0 // pred_fallthru
    _
  // Predicated region
  $region14: #{tpu_custom_call.1} parent=0 // pred_check
    _
  $region15: #{tpu_custom_call.1} parent=0 // pred_check_branch
    %17 = sbr.rel (0) target = $region17
  $region16: #{tpu_custom_call.1} parent=0 // pred_region
    _
  $region17: #{tpu_custom_call.1} parent=0 // pred_fallthru
    _
  // Predicated region
  $region18: #{tpu_custom_call.1} parent=0 // pred_check
    _
  $region19: #{tpu_custom_call.1} parent=0 // pred_check_branch
    %19 = sbr.rel (0) target = $region21
  $region20: #{tpu_custom_call.1} parent=0 // pred_region
    _
  $region21: #{tpu_custom_call.1} parent=0 // pred_fallthru
    _
  %v20 = vld [vmem:[%s0] sm:$0xff]
  %v21 = vld [vmem:[%s0 + $0x8] sm:$0xff]
  %v22 = vld [vmem:[%s1] sm:$0xff]
  %v23 = vld [vmem:[%s1 + $0x8] sm:$0xff]
  %v24 = vld [vmem:[%s1 + $0x10] sm:$0xff]
  %v25 = vld [vmem:[%s1 + $0x18] sm:$0xff]
  %v26 = vld [vmem:[%s2] sm:$0x1]
  %v28 = vlaneseq
  %v29 = vshrl.u32 %v28, 7
  %v30 = vsub.s32 0, %v29
  %v31 = vrot.slane %v26, %v30
  %vm33 = vcmask 261120
  %v35 = vsel %vm33, %v20, 0
  %v38 = vsel %vm33, %v21, 0
  %40 = vmatprep.subr.mxu0 0.0
  %41 = vmatpush1.msra.mxu0 %v22
  %42 = vmatprep.subr.mxu0 0.0
  %43 = vmatpush1.msra.mxu0 %v23
  %44 = vmatprep.subr.mxu0 0.0
  %45 = vmatpush1.msra.mxu0 %v24
  %46 = vmatprep.subr.mxu0 0.0
  %47 = vmatpush1.msra.mxu0 %v25
  %48 = vmatprep.subr.mxu0 0.0
  %49 = vmatpush1.msra.mxu0 0.0
  %50 = vmatprep.subr.mxu0 0.0
  %51 = vmatpush1.msra.mxu0 0.0
  %52 = vmatprep.subr.mxu0 0.0
  %53 = vmatpush1.msra.mxu0 0.0
  %54 = vmatprep.subr.mxu0 0.0
  %55 = vmatpush1.msra.mxu0 0.0
  %56 = vmatprep.subr.mxu0 0.0
  %57 = vmatpush1.msra.mxu0 0.0
  %58 = vmatprep.subr.mxu0 0.0
  %59 = vmatpush1.msra.mxu0 0.0
  %60 = vmatprep.subr.mxu0 0.0
  %61 = vmatpush1.msra.mxu0 0.0
  %62 = vmatprep.subr.mxu0 0.0
  %63 = vmatpush1.msra.mxu0 0.0
  %64 = vmatprep.subr.mxu0 0.0
  %65 = vmatpush1.msra.mxu0 0.0
  %66 = vmatprep.subr.mxu0 0.0
  %67 = vmatpush1.msra.mxu0 0.0
  %68 = vmatprep.subr.mxu0 0.0
  %69 = vmatpush1.msra.mxu0 0.0
  %70 = vmatprep.subr.mxu0 0.0
  %71 = vmatpush1.msra.mxu0 0.0
  %72 = vmatprep.subr.mxu0 0.0
  %73 = vmatpush1.msra.mxu0 0.0
  %74 = vmatprep.subr.mxu0 0.0
  %75 = vmatpush1.msra.mxu0 0.0
  %76 = vmatprep.subr.mxu0 0.0
  %77 = vmatpush1.msra.mxu0 0.0
  %78 = vmatprep.subr.mxu0 0.0
  %79 = vmatpush1.msra.mxu0 0.0
  %80 = vmatprep.subr.mxu0 0.0
  %81 = vmatpush1.msra.mxu0 0.0
  %82 = vmatprep.subr.mxu0 0.0
  %83 = vmatpush1.msra.mxu0 0.0
  %84 = vmatprep.subr.mxu0 0.0
  %85 = vmatpush1.msra.mxu0 0.0
  %86 = vmatprep.subr.mxu0 0.0
  %87 = vmatpush1.msra.mxu0 0.0
  %88 = vmatprep.subr.mxu0 0.0
  %89 = vmatpush1.msra.mxu0 0.0
  %90 = vmatprep.subr.mxu0 0.0
  %91 = vmatpush1.msra.mxu0 0.0
  %92 = vmatprep.subr.mxu0 0.0
  %93 = vmatpush1.msra.mxu0 0.0
  %94 = vmatprep.subr.mxu0 0.0
  %95 = vmatpush1.msra.mxu0 0.0
  %96 = vmatprep.subr.mxu0 0.0
  %97 = vmatpush1.msra.mxu0 0.0
  %98 = vmatprep.subr.mxu0 0.0
  %99 = vmatpush1.msra.mxu0 0.0
  %100 = vmatprep.subr.mxu0 0.0
  %101 = vmatpush1.msra.mxu0 0.0
  %102 = vmatprep.subr.mxu0 0.0
  %103 = vmatpush1.msra.mxu0 0.0
  %104 = vmatprep.mubr.f32.mxu0 0.0
  %105 = vmatmul.mubr.f32.gmra.mrb[0].mxu0 %v35
  %v106 = vpop.f32.mrb[0].mxu0
  %v107 = vadd.f32 %v31, %v106
  %v108 = vpop.f32.mrb[0].mxu0
  %109 = vmatprep.mubr.f32.mxu0 0.0
  %110 = vmatmul.mubr.f32.gmra.mrb[0].mxu0 %v38
  %v111 = vpop.f32.mrb[0].mxu0
  %v112 = vadd.f32 %v31, %v111
  %v113 = vpop.f32.mrb[0].mxu0
  %114 = vdwg.mxu0
  %vm115 = vcmp.ge.f32.partialorder %v107, 0.0
  %vm116 = vcmp.ge.f32.partialorder %v112, 0.0
  %v117 = vmul.f32 %v107, 0.01
  %v118 = vmul.f32 %v112, 0.01
  %v119 = vsel %vm115, %v107, %v117
  %v120 = vsel %vm116, %v112, %v118
  %vm121 = vcmask 64512
  %v122 = vsel %vm121, %v119, 0.0
  %123 = vadd.xlane.f32.xlu0 %v122
  %v124 = vpop.xlane.xlu0 %123
  %v125 = vsel %vm121, %v120, 0.0
  %126 = vadd.xlane.f32.xlu0 %v125
  %v127 = vpop.xlane.xlu0 %126
  %v128 = vrcp.pop 8.0
  %v129 = vmul.f32 %v124, %v128
  %v130 = vmul.f32 %v127, %v128
  %v131 = vsub.f32 %v119, %v129
  %v132 = vsub.f32 %v120, %v130
  %v133 = vmul.f32 %v131, %v131
  %v134 = vmul.f32 %v132, %v132
  %v135 = vsel %vm121, %v133, 0.0
  %136 = vadd.xlane.f32.xlu0 %v135
  %v137 = vpop.xlane.xlu0 %136
  %v138 = vsel %vm121, %v134, 0.0
  %139 = vadd.xlane.f32.xlu0 %v138
  %v140 = vpop.xlane.xlu0 %139
  %v141 = vmul.f32 %v137, %v128
  %v142 = vmul.f32 %v140, %v128
  %v143 = vadd.f32 %v141, 1e-05
  %v144 = vadd.f32 %v142, 1e-05
  %v145 = vrsqrt.pop %v143
  %v146 = vrsqrt.pop %v144
  %v147 = vmul.f32 %v131, %v145
  %v148 = vmul.f32 %v132, %v146
  %v149 = vld [vmem:[%s3] sm:$0x1]
  %v151 = vlaneseq
  %v152 = vshrl.u32 %v151, 7
  %v153 = vsub.s32 0, %v152
  %v154 = vrot.slane %v149, %v153
  %v156 = vmul.f32 %v147, %v154
  %v157 = vmul.f32 %v148, %v154
  %v158 = vld [vmem:[%s4] sm:$0x1]
  %v160 = vlaneseq
  %v161 = vshrl.u32 %v160, 7
  %v162 = vsub.s32 0, %v161
  %v163 = vrot.slane %v158, %v162
  %v165 = vadd.f32 %v156, %v163
  %v166 = vadd.f32 %v157, %v163
  %v167 = vsel %vm121, %v165, -inf
  %168 = vmax.xlane.f32.xlu0 %v167
  %v169 = vpop.xlane.xlu0 %168
  %v170 = vsel %vm121, %v166, -inf
  %171 = vmax.xlane.f32.xlu0 %v170
  %v172 = vpop.xlane.xlu0 %171
  %v173 = vsub.f32 %v165, %v169
  %v174 = vsub.f32 %v166, %v172
  %v175 = vmul.f32 %v173, 1.442695
  %v176 = vpow.pop %v175
  %v177 = vmul.f32 %v174, 1.442695
  %v178 = vpow.pop %v177
  %v179 = vsel %vm121, %v176, 0.0
  %180 = vadd.xlane.f32.xlu0 %v179
  %v181 = vpop.xlane.xlu0 %180
  %v182 = vsel %vm121, %v178, 0.0
  %183 = vadd.xlane.f32.xlu0 %v182
  %v184 = vpop.xlane.xlu0 %183
  %v185 = vrcp.pop %v181
  %v186 = vrcp.pop %v184
  %v187 = vmul.f32 %v176, %v185
  %v188 = vmul.f32 %v178, %v186
  %189 = vst.msk [vmem:[%s5] sm:$0xff] %vm121, %v187
  %190 = vst.msk [vmem:[%s5 + $0x8] sm:$0xff] %vm121, %v188
  // Predicated region
  $region22: #{tpu_custom_call.1} parent=0 // pred_check
    _
  $region23: #{tpu_custom_call.1} parent=0 // pred_check_branch
    %192 = sbr.rel (0) target = $region25
  $region24: #{tpu_custom_call.1} parent=0 // pred_region
    _
  $region25: #{tpu_custom_call.1} parent=0 // pred_fallthru
    _
  // Predicated region
  $region26: #{tpu_custom_call.1} parent=0 // pred_check
    _
  $region27: #{tpu_custom_call.1} parent=0 // pred_check_branch
    %194 = sbr.rel (0) target = $region29
  $region28: #{tpu_custom_call.1} parent=0 // pred_region
    _
  $region29: #{tpu_custom_call.1} parent=0 // pred_fallthru
    _

</llo_original>
